<compile_context>
chip_gen: v7x
topology: tpu7x:2x2x1
jax: 0.10.0
libtpu: 0.0.40
codegen_flags: <defaults>
</compile_context>

<pallas_src>
import functools

import jax
import jax.numpy as jnp
from jax import lax
from jax.experimental import pallas as pl
from jax.experimental.pallas import tpu as pltpu
import numpy as np

MARGIN = 1.0


def transe_hinge_kernel(idx_ref, tab_t_ref, out_ref, *, margin, compute_dtype):
    """One batch tile: hinge(margin + ||h+r-t||_pos - ||h+r-t||_neg)."""
    tab_t = tab_t_ref[...]                          # (D, V), grid-invariant
    v = tab_t.shape[1]

    idx = idx_ref[0]                                # (3, 2*TB) int32, batch on lanes
    n2 = idx.shape[1]
    tb = n2 // 2

    h = idx[0:1, :]                                 # (1, 2*TB)
    t = idx[1:2, :]
    r = idx[2:3, :]

    # Signed one-hot selector on the sublane (vocab) axis, built in int32.
    # Column j of (tab_t @ sel) == table[h_j] + table[r_j] - table[t_j].
    row = lax.broadcasted_iota(jnp.int32, (v, n2), 0)        # (V, 2*TB)
    sel_i = ((row == h).astype(jnp.int32)
             + (row == r).astype(jnp.int32)
             - (row == t).astype(jnp.int32))                 # (V, 2*TB) int32
    sel = sel_i.astype(compute_dtype)               # single cast; +-1 exact in bf16

    # (D, V) @ (V, 2*TB) -> (D, 2*TB), f32 accumulation on the MXU.
    diff_t = jnp.dot(tab_t, sel, preferred_element_type=jnp.float32)

    # Squared L2 over the embedding dim = sublane reduce -> (1, 2*TB).
    dist = jnp.sqrt(jnp.sum(diff_t * diff_t, axis=0, keepdims=True))

    pos_d = dist[:, :tb]                            # (1, TB)
    neg_d = dist[:, tb:]                            # (1, TB)
    out_ref[0] = jnp.maximum(margin + pos_d - neg_d, 0.0)    # lane-dense (1, TB)


def _default_tile(b):
    """Whole batch for small B; >= 2 fat (>=128) tiles for large B (v7x 2 TCs)."""
    if b <= 256:
        return b
    for cand in (1024, 512, 256, 128):
        if b % cand == 0 and b // cand >= 2:
            return cand
    return b


def transe_forward(pos_triples, neg_triples, table, *, margin=MARGIN,
                   tb=None, compute_dtype=jnp.float32):
    """Pallas TransE forward: returns the scalar hinge loss (matches PyTorch)."""
    b = pos_triples.shape[0]
    v, d = table.shape

    if tb is None:
        tb = _default_tile(b)
    assert b % tb == 0, "batch must be divisible by the batch tile"
    num_tiles = b // tb

    # Wrapper-side layout plumbing (done once by XLA, not per grid step):
    #   per-tile [pos | neg] columns, batch on the last (lane) axis.
    pos = pos_triples.astype(jnp.int32).reshape(num_tiles, tb, 3)
    neg = neg_triples.astype(jnp.int32).reshape(num_tiles, tb, 3)
    idx_t = jnp.transpose(jnp.concatenate([pos, neg], axis=1), (0, 2, 1))
    # idx_t: (num_tiles, 3, 2*tb) int32
    tab_t = jnp.transpose(table).astype(compute_dtype)        # (D, V)

    per_example_hinge = pl.pallas_call(
        functools.partial(transe_hinge_kernel, margin=margin,
                          compute_dtype=compute_dtype),
        out_shape=jax.ShapeDtypeStruct((num_tiles, 1, tb), jnp.float32),
        grid=(num_tiles,),
        in_specs=[
            pl.BlockSpec((1, 3, 2 * tb), lambda i: (i, 0, 0)),
            # Grid-invariant table block (constant index_map) stays resident.
            pl.BlockSpec((d, v), lambda i: (0, 0)),
        ],
        # Disjoint per-tile, lane-dense output blocks -> safe under "parallel".
        out_specs=pl.BlockSpec((1, 1, tb), lambda i: (i, 0, 0)),
        compiler_params=pltpu.CompilerParams(
            dimension_semantics=("parallel",),
            # 32 MiB is ample for these shapes on all of v5e/v6e/v7x; raise on
            # v5e/v6e (and cap <= ~56 MiB on v7x) only if TB/V are scaled up.
            vmem_limit_bytes=32 * 1024 * 1024,
        ),
    )(idx_t, tab_t)
    return jnp.sum(per_example_hinge)


def transe_loss_ref(pos_triples, neg_triples, table, margin=MARGIN):
    """Pure-JAX reference matching the PyTorch module semantics (f32)."""
    def dist(tri):
        h, t, r = tri[:, 0], tri[:, 1], tri[:, 2]
        diff = table[h] + table[r] - table[t]
        return jnp.sqrt(jnp.sum(diff * diff, axis=1))
    return jnp.sum(jnp.maximum(margin + dist(pos_triples) - dist(neg_triples), 0.0))


if __name__ == "__main__":
    num_entities = 40
    num_relations = 24
    embedding_dim = 32
    batch_size = 16

    V = num_entities + num_relations

    key = jax.random.PRNGKey(0)
    k_tab, k_h, k_t, k_r, k_hn, k_tn = jax.random.split(key, 6)

    # Deterministic xavier_uniform_ init for nn.Embedding(V, D).weight.
    bound = float(np.sqrt(6.0 / (V + embedding_dim)))
    table = jax.random.uniform(
        k_tab, (V, embedding_dim), dtype=jnp.float32, minval=-bound, maxval=bound
    )

    # Positive triples: (h, t, r); relations indexed after entities.
    h_pos = jax.random.randint(k_h, (batch_size, 1), 0, num_entities)
    t_pos = jax.random.randint(k_t, (batch_size, 1), 0, num_entities)
    r_pos = jax.random.randint(
        k_r, (batch_size, 1), num_entities, num_entities + num_relations
    )
    positive_triples = jnp.concatenate([h_pos, t_pos, r_pos], axis=1).astype(jnp.int32)

    # Negative triples: corrupt head and tail, keep relation.
    h_neg = jax.random.randint(k_hn, (batch_size, 1), 0, num_entities)
    t_neg = jax.random.randint(k_tn, (batch_size, 1), 0, num_entities)
    negative_triples = jnp.concatenate([h_neg, t_neg, r_pos], axis=1).astype(jnp.int32)

    loss_ref = transe_loss_ref(positive_triples, negative_triples, table)

    # Default f32 path: matches the PyTorch/f32 reference closely.
    loss_f32 = jax.block_until_ready(
        transe_forward(positive_triples, negative_triples, table))
    np.testing.assert_allclose(np.asarray(loss_f32), np.asarray(loss_ref),
                               rtol=1e-4, atol=1e-4)

    # bf16 MXU path: table rounding only (selector is exact +-1 in bf16).
    loss_bf16 = jax.block_until_ready(
        transe_forward(positive_triples, negative_triples, table,
                       compute_dtype=jnp.bfloat16))
    np.testing.assert_allclose(np.asarray(loss_bf16), np.asarray(loss_ref),
                               rtol=5e-2, atol=5e-2)

    print("KERNEL_OK")
</pallas_src>

<mosaic_0001>
module attributes {stable_mosaic.version = 11 : i64} {
  func.func @transe_hinge_kernel(%arg0: i32, %arg1: memref<1x3x32xi32, #tpu.memory_space<vmem>>, %arg2: memref<32x64xf32, #tpu.memory_space<vmem>>, %arg3: memref<1x1x16xf32, #tpu.memory_space<vmem>>) attributes {dimension_semantics = [#tpu.dimension_semantics<parallel>], iteration_bounds = array<i64: 1>, scalar_prefetch = 0 : i64, scratch_operands = 0 : i64, tpu.core_type = #tpu.core_type<tc>, window_params = [{transform_indices = @transform_0, window_bounds = array<i64: 1, 3, 32>}, {pipeline_mode = #tpu.pipeline_mode<synchronous>, transform_indices = @transform_1, window_bounds = array<i64: 32, 64>}, {transform_indices = @transform_2, window_bounds = array<i64: 1, 1, 16>}]} {
    %c0 = arith.constant 0 : index
    %c0_0 = arith.constant 0 : index
    %0 = vector.load %arg2[%c0, %c0_0] : memref<32x64xf32, #tpu.memory_space<vmem>>, vector<32x64xf32>
    %c0_1 = arith.constant 0 : index
    %c0_2 = arith.constant 0 : index
    %c0_3 = arith.constant 0 : index
    %1 = vector.load %arg1[%c0_1, %c0_2, %c0_3] : memref<1x3x32xi32, #tpu.memory_space<vmem>>, vector<1x3x32xi32>
    %2 = vector.shape_cast %1 : vector<1x3x32xi32> to vector<3x32xi32>
    %3 = vector.extract_strided_slice %2 {offsets = [0, 0], sizes = [1, 32], strides = [1, 1]} : vector<3x32xi32> to vector<1x32xi32>
    %4 = vector.extract_strided_slice %2 {offsets = [1, 0], sizes = [1, 32], strides = [1, 1]} : vector<3x32xi32> to vector<1x32xi32>
    %5 = vector.extract_strided_slice %2 {offsets = [2, 0], sizes = [1, 32], strides = [1, 1]} : vector<3x32xi32> to vector<1x32xi32>
    %6 = tpu.iota {dimensions = array<i32: 0>} : vector<64x32xi32>
    %7 = vector.broadcast %3 : vector<1x32xi32> to vector<64x32xi32>
    %8 = arith.cmpi eq, %6, %7 : vector<64x32xi32>
    %9 = arith.extui %8 : vector<64x32xi1> to vector<64x32xi32>
    %10 = vector.broadcast %5 : vector<1x32xi32> to vector<64x32xi32>
    %11 = arith.cmpi eq, %6, %10 : vector<64x32xi32>
    %12 = arith.extui %11 : vector<64x32xi1> to vector<64x32xi32>
    %13 = arith.addi %9, %12 : vector<64x32xi32>
    %14 = vector.broadcast %4 : vector<1x32xi32> to vector<64x32xi32>
    %15 = arith.cmpi eq, %6, %14 : vector<64x32xi32>
    %16 = arith.extui %15 : vector<64x32xi1> to vector<64x32xi32>
    %17 = arith.subi %13, %16 : vector<64x32xi32>
    %18 = arith.sitofp %17 : vector<64x32xi32> to vector<64x32xf32>
    %cst = arith.constant dense<0.000000e+00> : vector<32x32xf32>
    %19 = tpu.matmul %0, %18, %cst {dimension_numbers = #tpu.dot_dimension_numbers<[1], [0], [0], [1], [0, 0, 1, 1], [], []>} : vector<32x64xf32>, vector<64x32xf32>, vector<32x32xf32> -> vector<32x32xf32>
    %20 = arith.mulf %19, %19 : vector<32x32xf32>
    %cst_4 = arith.constant dense<0.000000e+00> : vector<32xf32>
    %21 = vector.multi_reduction <add>, %20, %cst_4 [0] : vector<32x32xf32> to vector<32xf32>
    %22 = vector.shape_cast %21 : vector<32xf32> to vector<1x32xf32>
    %23 = math.sqrt %22 : vector<1x32xf32>
    %24 = vector.extract_strided_slice %23 {offsets = [0, 0], sizes = [1, 16], strides = [1, 1]} : vector<1x32xf32> to vector<1x16xf32>
    %25 = vector.extract_strided_slice %23 {offsets = [0, 16], sizes = [1, 16], strides = [1, 1]} : vector<1x32xf32> to vector<1x16xf32>
    %cst_5 = arith.constant 1.000000e+00 : f32
    %26 = vector.broadcast %cst_5 : f32 to vector<1x16xf32>
    %27 = arith.addf %26, %24 : vector<1x16xf32>
    %28 = arith.subf %27, %25 : vector<1x16xf32>
    %cst_6 = arith.constant 0.000000e+00 : f32
    %29 = vector.broadcast %cst_6 : f32 to vector<1x16xf32>
    %30 = arith.maximumf %28, %29 : vector<1x16xf32>
    %c0_7 = arith.constant 0 : index
    %c0_8 = arith.constant 0 : index
    %c0_9 = arith.constant 0 : index
    %31 = vector.load %arg3[%c0_7, %c0_8, %c0_9] : memref<1x1x16xf32, #tpu.memory_space<vmem>>, vector<1x1x16xf32>
    %32 = vector.shape_cast %31 : vector<1x1x16xf32> to vector<1x16xf32>
    %33 = vector.shape_cast %30 : vector<1x16xf32> to vector<1x1x16xf32>
    tpu.vector_store %arg3[%c0_7, %c0_8, %c0_9], %33 {strides = array<i32>} : memref<1x1x16xf32, #tpu.memory_space<vmem>>, vector<1x1x16xf32>,
    return
  }
  func.func @transform_0(%arg0: i32) -> (i32, i32, i32) {
    %c0_i32 = arith.constant 0 : i32
    %c0_i32_0 = arith.constant 0 : i32
    %c0_i32_1 = arith.constant 0 : i32
    return %arg0, %c0_i32, %c0_i32_0 : i32, i32, i32
  }
  func.func @transform_1(%arg0: i32) -> (i32, i32) {
    %c0_i32 = arith.constant 0 : i32
    %c0_i32_0 = arith.constant 0 : i32
    %c0_i32_1 = arith.constant 0 : i32
    return %c0_i32, %c0_i32_0 : i32, i32
  }
  func.func @transform_2(%arg0: i32) -> (i32, i32, i32) {
    %c0_i32 = arith.constant 0 : i32
    %c0_i32_0 = arith.constant 0 : i32
    %c0_i32_1 = arith.constant 0 : i32
    return %arg0, %c0_i32, %c0_i32_0 : i32, i32, i32
  }
}

</mosaic_0001>

<llo_original>
// kernel: tpu_custom_call.1
$region0: #{tpu_custom_call.1}
  #allocation0 [shape = 'u32[]', space=smem, size = 0x4, offset = 0x4, fixed_abs, tag = 'smem constant byte address 0x4 - core index']
  #allocation1 [shape = 'u32[144,128]{1,0:T(1,128)}', space=vmem, size = 0x12000, scoped, tag = 'internal scratch']
  %s0 = inlined_call_operand.vmem [shape: s32[1,3,32], index: 0, kind: input, shape index: {}]
  %s1 = inlined_call_operand.hbm [shape: f32[32,64], index: 1, kind: input, shape index: {}]
  %s2 = inlined_call_operand.hbm [shape: f32[1,1,16], index: 2, kind: output, shape index: {}]
  %s3 = sld [smem:[#allocation0]]
  $region22: #{tpu_custom_call.1} parent=0
    _
  %s5 = ssub.s32 1, %s3
  %s6 = scalar_select 0, %s5, %s3
  $region1: #{tpu_custom_call.1} parent=0
    #allocation2 [shape = 'u8[16384]{0}', space=vmem, size = 0x4000, scoped, tag = 'input window, operand 1, single buffered']
    #allocation3 [shape = 's32[1]{0}', space=sflag, size = 0x4, scoped, tag = 'scoped memory for tpu_custom_call.1']
    #allocation4 [shape = 's32[1]{0}', space=sflag, size = 0x4, scoped, tag = 'scoped memory for tpu_custom_call.1']
    #allocation5 [shape = 'u8[512]{0}', space=vmem, size = 0x400, scoped, tag = 'output window, operand 0, single buffered']
    %7 = vsyncpa [#allocation3], 0
    %8 = vsyncpa [#allocation4], 0
    // Predicated region
    $region2: #{tpu_custom_call.1} parent=1 // pred_check
      _
    $region3: #{tpu_custom_call.1} parent=1 // pred_check_branch
      %10 = sbr.rel (0) target = $region5
    $region4: #{tpu_custom_call.1} parent=1 // pred_region
      _
    $region5: #{tpu_custom_call.1} parent=1 // pred_fallthru
      _
    // Predicated region
    $region6: #{tpu_custom_call.1} parent=1 // pred_check
      _
    $region7: #{tpu_custom_call.1} parent=1 // pred_check_branch
      %12 = sbr.rel (0) target = $region9
    $region8: #{tpu_custom_call.1} parent=1 // pred_region
      %s14 = ssub.s32 512, 512
      %15 = vsyncadd [#allocation3], %s14
      %s16 = sshll.u32 [#allocation2], 4
      %s17 = int_to_ptr.vmem [resolvable:$true] %s16
      %22 = dma.hbm_to_vmem [thread:$0]  %s1, 512, %s17, [#allocation3], 128, 128, 8
    $region9: #{tpu_custom_call.1} parent=1 // pred_fallthru
      _
    // Predicated region
    $region10: #{tpu_custom_call.1} parent=1 // pred_check
      _
    $region11: #{tpu_custom_call.1} parent=1 // pred_check_branch
      %24 = sbr.rel (0) target = $region13
    $region12: #{tpu_custom_call.1} parent=1 // pred_region
      %25 = dma.done [#allocation3], 512
    $region13: #{tpu_custom_call.1} parent=1 // pred_fallthru
      _
    %v26 = vld [vmem:[#allocation2] sm:$0xff]
    %v27 = vld [vmem:[#allocation2 + $0x8] sm:$0xff]
    %v28 = vld [vmem:[#allocation2 + $0x10] sm:$0xff]
    %v29 = vld [vmem:[#allocation2 + $0x18] sm:$0xff]
    %v30 = vld [vmem:[%s0] sm:$0x7]
    %v31 = vlaneseq
    %v32 = vshrl.u32 %v31, 7
    %v33 = vadd.s32 %v32, 8
    %v34 = vadd.s32 %v32, 16
    %v35 = vadd.s32 %v32, 24
    %v36 = vadd.s32 %v32, 32
    %v37 = vadd.s32 %v32, 40
    %v38 = vadd.s32 %v32, 48
    %v39 = vadd.s32 %v32, 56
    %v40 = vlaneseq
    %v41 = vshrl.u32 %v40, 7
    %v42 = vsub.s32 0, %v41
    %v43 = vrot.slane %v30, %v42
    %vm44 = vcmp.eq.s32.totalorder %v32, %v43
    %vm45 = vcmp.eq.s32.totalorder %v33, %v43
    %vm46 = vcmp.eq.s32.totalorder %v34, %v43
    %vm47 = vcmp.eq.s32.totalorder %v35, %v43
    %vm48 = vcmp.eq.s32.totalorder %v36, %v43
    %vm49 = vcmp.eq.s32.totalorder %v37, %v43
    %vm50 = vcmp.eq.s32.totalorder %v38, %v43
    %vm51 = vcmp.eq.s32.totalorder %v39, %v43
    %v52 = vsel %vm44, 1, 0
    %v53 = vsel %vm45, 1, 0
    %v54 = vsel %vm46, 1, 0
    %v55 = vsel %vm47, 1, 0
    %v56 = vsel %vm48, 1, 0
    %v57 = vsel %vm49, 1, 0
    %v58 = vsel %vm50, 1, 0
    %v59 = vsel %vm51, 1, 0
    %v60 = vlaneseq
    %v61 = vshrl.u32 %v60, 7
    %v62 = vsub.s32 2, %v61
    %v63 = vrot.slane %v30, %v62
    %vm64 = vcmp.eq.s32.totalorder %v32, %v63
    %vm65 = vcmp.eq.s32.totalorder %v33, %v63
    %vm66 = vcmp.eq.s32.totalorder %v34, %v63
    %vm67 = vcmp.eq.s32.totalorder %v35, %v63
    %vm68 = vcmp.eq.s32.totalorder %v36, %v63
    %vm69 = vcmp.eq.s32.totalorder %v37, %v63
    %vm70 = vcmp.eq.s32.totalorder %v38, %v63
    %vm71 = vcmp.eq.s32.totalorder %v39, %v63
    %v72 = vsel %vm64, 1, 0
    %v73 = vsel %vm65, 1, 0
    %v74 = vsel %vm66, 1, 0
    %v75 = vsel %vm67, 1, 0
    %v76 = vsel %vm68, 1, 0
    %v77 = vsel %vm69, 1, 0
    %v78 = vsel %vm70, 1, 0
    %v79 = vsel %vm71, 1, 0
    %v80 = vadd.s32 %v52, %v72
    %v81 = vadd.s32 %v53, %v73
    %v82 = vadd.s32 %v54, %v74
    %v83 = vadd.s32 %v55, %v75
    %v84 = vadd.s32 %v56, %v76
    %v85 = vadd.s32 %v57, %v77
    %v86 = vadd.s32 %v58, %v78
    %v87 = vadd.s32 %v59, %v79
    %v88 = vlaneseq
    %v89 = vshrl.u32 %v88, 7
    %v90 = vsub.s32 1, %v89
    %v91 = vrot.slane %v30, %v90
    %vm92 = vcmp.eq.s32.totalorder %v32, %v91
    %vm93 = vcmp.eq.s32.totalorder %v33, %v91
    %vm94 = vcmp.eq.s32.totalorder %v34, %v91
    %vm95 = vcmp.eq.s32.totalorder %v35, %v91
    %vm96 = vcmp.eq.s32.totalorder %v36, %v91
    %vm97 = vcmp.eq.s32.totalorder %v37, %v91
    %vm98 = vcmp.eq.s32.totalorder %v38, %v91
    %vm99 = vcmp.eq.s32.totalorder %v39, %v91
    %v100 = vsel %vm92, 1, 0
    %v101 = vsel %vm93, 1, 0
    %v102 = vsel %vm94, 1, 0
    %v103 = vsel %vm95, 1, 0
    %v104 = vsel %vm96, 1, 0
    %v105 = vsel %vm97, 1, 0
    %v106 = vsel %vm98, 1, 0
    %v107 = vsel %vm99, 1, 0
    %v108 = vsub.s32 %v80, %v100
    %v109 = vsub.s32 %v81, %v101
    %v110 = vsub.s32 %v82, %v102
    %v111 = vsub.s32 %v83, %v103
    %v112 = vsub.s32 %v84, %v104
    %v113 = vsub.s32 %v85, %v105
    %v114 = vsub.s32 %v86, %v106
    %v115 = vsub.s32 %v87, %v107
    %v116 = vcvt.s32.f32 %v108
    %v117 = vcvt.s32.f32 %v109
    %v118 = vcvt.s32.f32 %v110
    %v119 = vcvt.s32.f32 %v111
    %v120 = vcvt.s32.f32 %v112
    %v121 = vcvt.s32.f32 %v113
    %v122 = vcvt.s32.f32 %v114
    %v123 = vcvt.s32.f32 %v115
    %vm124 = vcmask 523264
    %v126 = vsel %vm124, %v26, 0
    %v129 = vsel %vm124, %v27, 0
    %v132 = vsel %vm124, %v28, 0
    %v135 = vsel %vm124, %v29, 0
    %137 = vmatprep.subr.mxu0 0.0
    %138 = vmatpush1.msra.mxu0 %v116
    %139 = vmatprep.subr.mxu0 0.0
    %140 = vmatpush1.msra.mxu0 %v117
    %141 = vmatprep.subr.mxu0 0.0
    %142 = vmatpush1.msra.mxu0 %v118
    %143 = vmatprep.subr.mxu0 0.0
    %144 = vmatpush1.msra.mxu0 %v119
    %145 = vmatprep.subr.mxu0 0.0
    %146 = vmatpush1.msra.mxu0 %v120
    %147 = vmatprep.subr.mxu0 0.0
    %148 = vmatpush1.msra.mxu0 %v121
    %149 = vmatprep.subr.mxu0 0.0
    %150 = vmatpush1.msra.mxu0 %v122
    %151 = vmatprep.subr.mxu0 0.0
    %152 = vmatpush1.msra.mxu0 %v123
    %153 = vmatprep.subr.mxu0 0.0
    %154 = vmatpush1.msra.mxu0 0.0
    %155 = vmatprep.subr.mxu0 0.0
    %156 = vmatpush1.msra.mxu0 0.0
    %157 = vmatprep.subr.mxu0 0.0
    %158 = vmatpush1.msra.mxu0 0.0
    %159 = vmatprep.subr.mxu0 0.0
    %160 = vmatpush1.msra.mxu0 0.0
    %161 = vmatprep.subr.mxu0 0.0
    %162 = vmatpush1.msra.mxu0 0.0
    %163 = vmatprep.subr.mxu0 0.0
    %164 = vmatpush1.msra.mxu0 0.0
    %165 = vmatprep.subr.mxu0 0.0
    %166 = vmatpush1.msra.mxu0 0.0
    %167 = vmatprep.subr.mxu0 0.0
    %168 = vmatpush1.msra.mxu0 0.0
    %169 = vmatprep.subr.mxu0 0.0
    %170 = vmatpush1.msra.mxu0 0.0
    %171 = vmatprep.subr.mxu0 0.0
    %172 = vmatpush1.msra.mxu0 0.0
    %173 = vmatprep.subr.mxu0 0.0
    %174 = vmatpush1.msra.mxu0 0.0
    %175 = vmatprep.subr.mxu0 0.0
    %176 = vmatpush1.msra.mxu0 0.0
    %177 = vmatprep.subr.mxu0 0.0
    %178 = vmatpush1.msra.mxu0 0.0
    %179 = vmatprep.subr.mxu0 0.0
    %180 = vmatpush1.msra.mxu0 0.0
    %181 = vmatprep.subr.mxu0 0.0
    %182 = vmatpush1.msra.mxu0 0.0
    %183 = vmatprep.subr.mxu0 0.0
    %184 = vmatpush1.msra.mxu0 0.0
    %185 = vmatprep.subr.mxu0 0.0
    %186 = vmatpush1.msra.mxu0 0.0
    %187 = vmatprep.subr.mxu0 0.0
    %188 = vmatpush1.msra.mxu0 0.0
    %189 = vmatprep.subr.mxu0 0.0
    %190 = vmatpush1.msra.mxu0 0.0
    %191 = vmatprep.subr.mxu0 0.0
    %192 = vmatpush1.msra.mxu0 0.0
    %193 = vmatprep.subr.mxu0 0.0
    %194 = vmatpush1.msra.mxu0 0.0
    %195 = vmatprep.subr.mxu0 0.0
    %196 = vmatpush1.msra.mxu0 0.0
    %197 = vmatprep.subr.mxu0 0.0
    %198 = vmatpush1.msra.mxu0 0.0
    %199 = vmatprep.subr.mxu0 0.0
    %200 = vmatpush1.msra.mxu0 0.0
    %201 = vmatprep.mubr.f32.mxu0 0.0
    %202 = vmatmul.mubr.f32.gmra.mrb[0].mxu0 %v126
    %v203 = vpop.f32.mrb[0].mxu0
    %v204 = vadd.f32 0.0, %v203
    %v205 = vpop.f32.mrb[0].mxu0
    %206 = vmatprep.mubr.f32.mxu0 0.0
    %207 = vmatmul.mubr.f32.gmra.mrb[0].mxu0 %v129
    %v208 = vpop.f32.mrb[0].mxu0
    %v209 = vadd.f32 0.0, %v208
    %v210 = vpop.f32.mrb[0].mxu0
    %211 = vmatprep.mubr.f32.mxu0 0.0
    %212 = vmatmul.mubr.f32.gmra.mrb[0].mxu0 %v132
    %v213 = vpop.f32.mrb[0].mxu0
    %v214 = vadd.f32 0.0, %v213
    %v215 = vpop.f32.mrb[0].mxu0
    %216 = vmatprep.mubr.f32.mxu0 0.0
    %217 = vmatmul.mubr.f32.gmra.mrb[0].mxu0 %v135
    %v218 = vpop.f32.mrb[0].mxu0
    %v219 = vadd.f32 0.0, %v218
    %v220 = vpop.f32.mrb[0].mxu0
    %221 = vdwg.mxu0
    %v222 = vmul.f32 %v204, %v204
    %v223 = vmul.f32 %v209, %v209
    %v224 = vmul.f32 %v214, %v214
    %v225 = vmul.f32 %v219, %v219
    %vm226 = vcmask 261120
    %v227 = vsel %vm226, %v222, 0.0
    %v228 = vsel %vm226, %v223, 0.0
    %v229 = vadd.f32 %v227, %v228
    %v230 = vsel %vm226, %v224, 0.0
    %v231 = vadd.f32 %v229, %v230
    %v232 = vsel %vm226, %v225, 0.0
    %v233 = vadd.f32 %v231, %v232
    %v234 = vrot.slane %v233, 4
    %v235 = vadd.f32 %v233, %v234
    %v236 = vrot.slane %v235, 2
    %v237 = vadd.f32 %v235, %v236
    %v238 = vrot.slane %v237, 1
    %v239 = vadd.f32 %v237, %v238
    %v240 = vrsqrt.pop %v239
    %v241 = vmul.f32 %v239, %v240
    %vm242 = vcmp.eq.f32.partialorder %v239, inf
    %v243 = vsel %vm242, %v239, %v241
    %vm244 = vcmp.eq.f32.partialorder %v239, 0.0
    %v245 = vand.u32 %v239, 2147483648
    %v246 = vsel %vm244, %v245, %v243
    %v247 = vadd.f32 %v246, 1.0
    %249 = vrot.lane.b32.xlu0 %v246, 112
    %v250 = vpop.permute.xlu0 %249
    %v252 = vsub.f32 %v247, %v250
    %v253 = vmax.f32 %v252, 0.0
    %vm254 = vcmask 122880
    %255 = vst.msk [vmem:[#allocation5] sm:$0x1] %vm254, %v253
    // Predicated region
    $region14: #{tpu_custom_call.1} parent=1 // pred_check
      _
    $region15: #{tpu_custom_call.1} parent=1 // pred_check_branch
      %257 = sbr.rel (0) target = $region17
    $region16: #{tpu_custom_call.1} parent=1 // pred_region
      %s259 = ssub.s32 16, 16
      %260 = vsyncadd [#allocation4], %s259
      %s262 = sshll.u32 [#allocation5], 4
      %s263 = int_to_ptr.vmem [resolvable:$true] %s262
      %265 = dma.vmem_to_hbm [thread:$0]  %s263, 16, %s2, [#allocation4]
    $region17: #{tpu_custom_call.1} parent=1 // pred_fallthru
      _
    // Predicated region
    $region18: #{tpu_custom_call.1} parent=1 // pred_check
      _
    $region19: #{tpu_custom_call.1} parent=1 // pred_check_branch
      %267 = sbr.rel (0) target = $region21
    $region20: #{tpu_custom_call.1} parent=1 // pred_region
      %268 = dma.done [#allocation4], 16
    $region21: #{tpu_custom_call.1} parent=1 // pred_fallthru
      _
    %269 = vsyncpa [#allocation3], 1
    %270 = vsyncpa [#allocation4], 1

</llo_original>
